<compile_context>
chip_gen: v6e
topology: v6e:2x2x1
jax: 0.10.0
libtpu: 0.0.40
codegen_flags: <defaults>
</compile_context>

<pallas_src>
import jax
import jax.numpy as jnp
from jax.experimental import pallas as pl
from jax.experimental.pallas import tpu as pltpu


def _round_up(x, m):
    return ((x + m - 1) // m) * m


def _pick_vmem_limit():
    """Generation-aware scoped-VMEM budget (v7x has 64 MiB, v5e/v6e 128 MiB)."""
    cap = 64 * 1024 * 1024
    try:
        cap = int(getattr(pltpu.get_tpu_info(), "vmem_capacity_bytes", cap))
    except Exception:
        pass
    limit = min(cap - 16 * 1024 * 1024, 100 * 1024 * 1024)
    return int(max(limit, 32 * 1024 * 1024))


def _gnn_layer_kernel(a_ref, x_ref, w_ref, b_ref, o_ref, act_ref):
    """One grid step == one GraphConv layer.

    a_ref : [Np, Np]      bf16  dense adjacency (resident across layers)
    x_ref : [Np, Dp]      bf16  padded input features (resident)
    w_ref : [1, 2*Dp, Dp] bf16  stacked [W_rel; W_root] for this layer (streamed)
    b_ref : [1, 1, Dp]    f32   bias for this layer (streamed)
    o_ref : [Np, Dp]      bf16  output slab (written on last layer only)
    act_ref: [Np, Dp]     bf16  persistent activation scratch
    """
    l = pl.program_id(0)
    n_layers = pl.num_programs(0)

    # Seed the resident activation with the pre-padded bf16 input at layer 0.
    @pl.when(l == 0)
    def _():
        act_ref[...] = x_ref[...]

    xb = act_ref[...]                                             # [Np, Dp] bf16

    # Neighbor aggregation on the MXU: K = Np (lane-dense, multiple of 128).
    agg = jnp.dot(a_ref[...], xb, preferred_element_type=jnp.float32)

    # Fused lin_rel + lin_root: single K = 2*Dp matmul against stacked weights.
    # (agg -> bf16 re-quantization is a precision/speed tradeoff; see review.)
    cat = jnp.concatenate([agg.astype(jnp.bfloat16), xb], axis=-1)  # [Np, 2*Dp]
    out = jnp.dot(cat, w_ref[0], preferred_element_type=jnp.float32)
    out = out + b_ref[0]                                          # [1, Dp] bcast

    is_last = l == n_layers - 1

    @pl.when(jnp.logical_not(is_last))
    def _():
        act_ref[...] = jnp.maximum(out, 0.0).astype(act_ref.dtype)

    @pl.when(is_last)
    def _():
        o_ref[...] = out.astype(o_ref.dtype)                      # no ReLU on last


def init_gnn_params(key, n_layer, feature_len, dim):
    """Synthetic params matching GraphConv shapes.
       layer i: in = 2*feature_len if i == 0 else dim, out = dim.
       W_rel/W_root: [in, out] (lin weights, transposed), b_rel: [1, out]."""
    params = []
    for i in range(n_layer):
        in_ch = 2 * feature_len if i == 0 else dim
        key, k1, k2, k3 = jax.random.split(key, 4)
        w_rel = jax.random.normal(k1, (in_ch, dim), jnp.float32) * 0.1
        w_root = jax.random.normal(k2, (in_ch, dim), jnp.float32) * 0.1
        b_rel = jax.random.normal(k3, (1, dim), jnp.float32) * 0.1
        params.append((w_rel, w_root, b_rel))
    return params


def edge_index_to_dense_adj(edge_index, num_nodes):
    """A[dst, src] = multiplicity of edge src -> dst (sum aggregation)."""
    src, dst = edge_index[0], edge_index[1]
    adj = jnp.zeros((num_nodes, num_nodes), jnp.float32)
    return adj.at[dst, src].add(1.0)


def prepare_adjacency(edge_index, num_nodes, n_pad):
    """Densify + pad + bf16-cast ONCE per graph (hoisted out of forward)."""
    adj = edge_index_to_dense_adj(edge_index, num_nodes)
    adj_p = jnp.zeros((n_pad, n_pad), jnp.float32).at[:num_nodes, :num_nodes].set(adj)
    return adj_p.astype(jnp.bfloat16)  # small integer multiplicities: exact in bf16


def prepare_params_stacked(params, d_pad):
    """Stack each layer's [W_rel; W_root] into w_cat[l] in [2*Dp, Dp] (bf16)
    and biases into [L, 1, Dp] (f32). Done once per parameter set."""
    n_layer = len(params)
    w_cat = jnp.zeros((n_layer, 2 * d_pad, d_pad), jnp.float32)
    b_cat = jnp.zeros((n_layer, 1, d_pad), jnp.float32)
    for i, (w_rel, w_root, b) in enumerate(params):
        in_ch, out_ch = w_rel.shape
        w_cat = w_cat.at[i, :in_ch, :out_ch].set(w_rel)
        w_cat = w_cat.at[i, d_pad:d_pad + in_ch, :out_ch].set(w_root)
        b_cat = b_cat.at[i, 0, :out_ch].set(b[0])
    return w_cat.astype(jnp.bfloat16), b_cat


def gnn_forward_fused(x, adj_padded, w_cat, b_cat, *, dim, num_nodes):
    """Mirrors GNN.forward: n_layer GraphConvs, ReLU on all but the last,
    executed in a single fused pallas_call with a layer grid."""
    n_layer = w_cat.shape[0]
    n_pad = adj_padded.shape[0]
    d_pad = w_cat.shape[2]

    x_pad = jnp.zeros((n_pad, d_pad), jnp.bfloat16)
    x_pad = x_pad.at[:num_nodes, :x.shape[1]].set(x.astype(jnp.bfloat16))

    out = pl.pallas_call(
        _gnn_layer_kernel,
        out_shape=jax.ShapeDtypeStruct((n_pad, d_pad), jnp.bfloat16),
        grid_spec=pltpu.PrefetchScalarGridSpec(
            num_scalar_prefetch=0,
            grid=(n_layer,),
            in_specs=[
                # A and x: constant block index -> DMA'd once, VMEM-resident.
                pl.BlockSpec((n_pad, n_pad), lambda l: (0, 0)),
                pl.BlockSpec((n_pad, d_pad), lambda l: (0, 0)),
                # weights/biases: streamed (double-buffered) per layer.
                pl.BlockSpec((1, 2 * d_pad, d_pad), lambda l: (l, 0, 0)),
                pl.BlockSpec((1, 1, d_pad), lambda l: (l, 0, 0)),
            ],
            out_specs=pl.BlockSpec((n_pad, d_pad), lambda l: (0, 0)),
            scratch_shapes=[pltpu.VMEM((n_pad, d_pad), jnp.bfloat16)],
        ),
        compiler_params=pltpu.CompilerParams(
            dimension_semantics=("arbitrary",),   # layers are sequential
            vmem_limit_bytes=_pick_vmem_limit(),
        ),
    )(adj_padded, x_pad, w_cat, b_cat)
    return out[:num_nodes, :dim]                  # bf16, lane-dense slab sliced


def gnn_forward_ref(x, edge_index, params):
    """Pure-JAX f32 reference for correctness checking."""
    n = x.shape[0]
    adj = edge_index_to_dense_adj(edge_index, n)
    n_layer = len(params)
    for i, (w_rel, w_root, b_rel) in enumerate(params):
        x = (adj @ x) @ w_rel + x @ w_root + b_rel
        if i != n_layer - 1:
            x = jnp.maximum(x, 0.0)
    return x


if __name__ == "__main__":
    # Small shapes consistent with the module.
    n_layer = 3
    feature_len = 4          # -> first-layer in_channels = 2 * feature_len = 8
    dim = 32
    num_nodes = 8
    num_edges = 16

    key = jax.random.PRNGKey(0)
    key, kx, ke, kp = jax.random.split(key, 4)

    x = jax.random.normal(kx, (num_nodes, 2 * feature_len), jnp.float32)
    edge_index = jax.random.randint(ke, (2, num_edges), 0, num_nodes, jnp.int32)
    params = init_gnn_params(kp, n_layer, feature_len, dim)

    # One-time per-graph / per-parameter preprocessing (hoisted out of forward).
    n_pad = max(_round_up(num_nodes, 128), 128)                    # lane-dense nodes
    d_pad = max(_round_up(max(2 * feature_len, dim), 128), 128)    # lane-dense features
    adj_padded = prepare_adjacency(edge_index, num_nodes, n_pad)
    w_cat, b_cat = prepare_params_stacked(params, d_pad)

    out = gnn_forward_fused(x, adj_padded, w_cat, b_cat, dim=dim, num_nodes=num_nodes)
    out = jax.block_until_ready(out)

    ref = gnn_forward_ref(x, edge_index, params)
    assert out.shape == (num_nodes, dim), out.shape
    # bf16 MXU inputs / bf16 activations / bf16 output, f32 accumulation:
    # compare against the f32 reference with a bf16-scale tolerance.
    assert jnp.allclose(out.astype(jnp.float32), ref, atol=5e-2, rtol=5e-2), \
        "mismatch vs reference"

    print("KERNEL_OK")
</pallas_src>

<mosaic_0001>
module attributes {stable_mosaic.version = 11 : i64} {
  func.func @_gnn_layer_kernel(%arg0: i32, %arg1: memref<128x128xbf16, #tpu.memory_space<vmem>>, %arg2: memref<128x128xbf16, #tpu.memory_space<vmem>>, %arg3: memref<1x256x128xbf16, #tpu.memory_space<vmem>>, %arg4: memref<1x1x128xf32, #tpu.memory_space<vmem>>, %arg5: memref<128x128xbf16, #tpu.memory_space<vmem>>, %arg6: memref<128x128xbf16, #tpu.memory_space<vmem>>) attributes {dimension_semantics = [#tpu.dimension_semantics<arbitrary>], iteration_bounds = array<i64: 3>, scalar_prefetch = 0 : i64, scratch_operands = 1 : i64, tpu.core_type = #tpu.core_type<tc>, window_params = [{pipeline_mode = #tpu.pipeline_mode<synchronous>, transform_indices = @transform_0, window_bounds = array<i64: 128, 128>}, {pipeline_mode = #tpu.pipeline_mode<synchronous>, transform_indices = @transform_1, window_bounds = array<i64: 128, 128>}, {transform_indices = @transform_2, window_bounds = array<i64: 1, 256, 128>}, {transform_indices = @transform_3, window_bounds = array<i64: 1, 1, 128>}, {pipeline_mode = #tpu.pipeline_mode<synchronous>, transform_indices = @transform_4, window_bounds = array<i64: 128, 128>}]} {
    %c0_i32 = arith.constant 0 : i32
    %0 = arith.cmpi eq, %arg0, %c0_i32 : i32
    %1 = arith.extui %0 : i1 to i32
    %c0_i32_0 = arith.constant 0 : i32
    %2 = arith.cmpi ne, %1, %c0_i32_0 : i32
    scf.if %2 {
      %c0_13 = arith.constant 0 : index
      %c0_14 = arith.constant 0 : index
      %21 = vector.load %arg2[%c0_13, %c0_14] : memref<128x128xbf16, #tpu.memory_space<vmem>>, vector<128x128xbf16>
      %c0_15 = arith.constant 0 : index
      %c0_16 = arith.constant 0 : index
      %22 = vector.load %arg6[%c0_15, %c0_16] : memref<128x128xbf16, #tpu.memory_space<vmem>>, vector<128x128xbf16>
      tpu.vector_store %arg6[%c0_15, %c0_16], %21 {strides = array<i32>} : memref<128x128xbf16, #tpu.memory_space<vmem>>, vector<128x128xbf16>,
    } else {
    }
    %c0 = arith.constant 0 : index
    %c0_1 = arith.constant 0 : index
    %3 = vector.load %arg6[%c0, %c0_1] : memref<128x128xbf16, #tpu.memory_space<vmem>>, vector<128x128xbf16>
    %c0_2 = arith.constant 0 : index
    %c0_3 = arith.constant 0 : index
    %4 = vector.load %arg1[%c0_2, %c0_3] : memref<128x128xbf16, #tpu.memory_space<vmem>>, vector<128x128xbf16>
    %cst = arith.constant dense<0.000000e+00> : vector<128x128xf32>
    %5 = tpu.matmul %4, %3, %cst {dimension_numbers = #tpu.dot_dimension_numbers<[1], [0], [0], [1], [0, 0, 1, 1], [], []>} : vector<128x128xbf16>, vector<128x128xbf16>, vector<128x128xf32> -> vector<128x128xf32>
    %6 = arith.truncf %5 : vector<128x128xf32> to vector<128x128xbf16>
    %7 = tpu.concatenate %6, %3 in 1 : vector<128x128xbf16>, vector<128x128xbf16> -> vector<128x256xbf16>
    %c0_4 = arith.constant 0 : index
    %c0_5 = arith.constant 0 : index
    %c0_6 = arith.constant 0 : index
    %8 = vector.load %arg3[%c0_4, %c0_5, %c0_6] : memref<1x256x128xbf16, #tpu.memory_space<vmem>>, vector<1x256x128xbf16>
    %9 = vector.shape_cast %8 : vector<1x256x128xbf16> to vector<256x128xbf16>
    %cst_7 = arith.constant dense<0.000000e+00> : vector<128x128xf32>
    %10 = tpu.matmul %7, %9, %cst_7 {dimension_numbers = #tpu.dot_dimension_numbers<[1], [0], [0], [1], [0, 0, 1, 1], [], []>} : vector<128x256xbf16>, vector<256x128xbf16>, vector<128x128xf32> -> vector<128x128xf32>
    %c0_8 = arith.constant 0 : index
    %c0_9 = arith.constant 0 : index
    %c0_10 = arith.constant 0 : index
    %11 = vector.load %arg4[%c0_8, %c0_9, %c0_10] : memref<1x1x128xf32, #tpu.memory_space<vmem>>, vector<1x1x128xf32>
    %12 = vector.shape_cast %11 : vector<1x1x128xf32> to vector<1x128xf32>
    %13 = vector.broadcast %12 : vector<1x128xf32> to vector<128x128xf32>
    %14 = arith.addf %10, %13 : vector<128x128xf32>
    %c2_i32 = arith.constant 2 : i32
    %15 = arith.cmpi eq, %arg0, %c2_i32 : i32
    %true = arith.constant true
    %16 = arith.xori %15, %true : i1
    %17 = arith.extui %16 : i1 to i32
    %c0_i32_11 = arith.constant 0 : i32
    %18 = arith.cmpi ne, %17, %c0_i32_11 : i32
    scf.if %18 {
      %cst_13 = arith.constant 0.000000e+00 : f32
      %21 = vector.broadcast %cst_13 : f32 to vector<128x128xf32>
      %22 = arith.maximumf %14, %21 : vector<128x128xf32>
      %23 = arith.truncf %22 : vector<128x128xf32> to vector<128x128xbf16>
      %c0_14 = arith.constant 0 : index
      %c0_15 = arith.constant 0 : index
      %24 = vector.load %arg6[%c0_14, %c0_15] : memref<128x128xbf16, #tpu.memory_space<vmem>>, vector<128x128xbf16>
      tpu.vector_store %arg6[%c0_14, %c0_15], %23 {strides = array<i32>} : memref<128x128xbf16, #tpu.memory_space<vmem>>, vector<128x128xbf16>,
    } else {
    }
    %19 = arith.extui %15 : i1 to i32
    %c0_i32_12 = arith.constant 0 : i32
    %20 = arith.cmpi ne, %19, %c0_i32_12 : i32
    scf.if %20 {
      %21 = arith.truncf %14 : vector<128x128xf32> to vector<128x128xbf16>
      %c0_13 = arith.constant 0 : index
      %c0_14 = arith.constant 0 : index
      %22 = vector.load %arg5[%c0_13, %c0_14] : memref<128x128xbf16, #tpu.memory_space<vmem>>, vector<128x128xbf16>
      tpu.vector_store %arg5[%c0_13, %c0_14], %21 {strides = array<i32>} : memref<128x128xbf16, #tpu.memory_space<vmem>>, vector<128x128xbf16>,
    } else {
    }
    return
  }
  func.func @transform_0(%arg0: i32) -> (i32, i32) {
    %c0_i32 = arith.constant 0 : i32
    %c0_i32_0 = arith.constant 0 : i32
    %c0_i32_1 = arith.constant 0 : i32
    return %c0_i32, %c0_i32_0 : i32, i32
  }
  func.func @transform_1(%arg0: i32) -> (i32, i32) {
    %c0_i32 = arith.constant 0 : i32
    %c0_i32_0 = arith.constant 0 : i32
    %c0_i32_1 = arith.constant 0 : i32
    return %c0_i32, %c0_i32_0 : i32, i32
  }
  func.func @transform_2(%arg0: i32) -> (i32, i32, i32) {
    %c0_i32 = arith.constant 0 : i32
    %c0_i32_0 = arith.constant 0 : i32
    %c0_i32_1 = arith.constant 0 : i32
    return %arg0, %c0_i32, %c0_i32_0 : i32, i32, i32
  }
  func.func @transform_3(%arg0: i32) -> (i32, i32, i32) {
    %c0_i32 = arith.constant 0 : i32
    %c0_i32_0 = arith.constant 0 : i32
    %c0_i32_1 = arith.constant 0 : i32
    return %arg0, %c0_i32, %c0_i32_0 : i32, i32, i32
  }
  func.func @transform_4(%arg0: i32) -> (i32, i32) {
    %c0_i32 = arith.constant 0 : i32
    %c0_i32_0 = arith.constant 0 : i32
    %c0_i32_1 = arith.constant 0 : i32
    return %c0_i32, %c0_i32_0 : i32, i32
  }
}

</mosaic_0001>

<llo_original>
// kernel: tpu_custom_call.1
$region0: #{tpu_custom_call.1}
  #allocation0 [shape = 'u32[]', space=smem, size = 0x4, offset = 0x4, fixed_abs, tag = 'smem constant byte address 0x4 - core index']
  #allocation1 [shape = 'u32[144,128]{1,0:T(1,128)}', space=vmem, size = 0x12000, scoped, tag = 'internal scratch']
  #allocation2 [shape = 'bf16[128,128]{1,0:T(8,128)(2,1)}', space=vmem, size = 0x8000, scoped, tag = 'scratch operand']
  %s0 = inlined_call_operand.hbm [shape: bf16[128,128], index: 0, kind: input, shape index: {}]
  %s1 = inlined_call_operand.hbm [shape: bf16[128,128], index: 1, kind: input, shape index: {}]
  %s2 = inlined_call_operand.hbm [shape: bf16[3,256,128], index: 2, kind: input, shape index: {}]
  %s3 = inlined_call_operand.vmem [shape: f32[3,1,128], index: 3, kind: input, shape index: {}]
  %s4 = inlined_call_operand.hbm [shape: bf16[128,128], index: 4, kind: output, shape index: {}]
  %s5 = sld [smem:[#allocation0]]
  $region73: #{tpu_custom_call.1} parent=0
    _
  %s7 = ssub.s32 1, %s5
  %s8 = scalar_select 0, %s7, %s5
  $region1: #{tpu_custom_call.1} parent=0
    #allocation3 [shape = 'u8[32768]{0}', space=vmem, size = 0x8000, scoped, tag = 'input window, operand 0, single buffered']
    #allocation4 [shape = 's32[2]{0}', space=sflag, size = 0x8, scoped, tag = 'scoped memory for tpu_custom_call.1']
    #allocation5 [shape = 's32[2]{0}', space=sflag, size = 0x8, scoped, tag = 'scoped memory for tpu_custom_call.1']
    #allocation6 [shape = 'u8[32768]{0}', space=vmem, size = 0x8000, scoped, tag = 'input window, operand 1, single buffered']
    #allocation7 [shape = 's32[1]{0}', space=sflag, size = 0x4, scoped, tag = 'scoped memory for tpu_custom_call.1']
    #allocation8 [shape = 'u8[131072]{0}', space=vmem, size = 0x20000, scoped, tag = 'input window, operand 2']
    #allocation9 [shape = 'u8[32768]{0}', space=vmem, size = 0x8000, scoped, tag = 'output window, operand 0, single buffered']
    %9 = vsyncpa [#allocation4], 0
    %10 = vsyncpa [#allocation7], 0
    %11 = vsyncpa [#allocation5], 0
    loop: start=0, step=1, limit=5
    $region2: #{tpu_custom_call.1} parent=1 // loop_pre_header
      _
    $region3: #{tpu_custom_call.1} parent=1 // loop_header
      %s13 = sphi 0, %s17
      %p14 = scmp.ge.s32.totalorder %s13, 5
      %s21 = sphi 0, %s21
      %s23 = sphi 0, %s21
      %s24 = sphi 0, %s23
      %s38 = sphi 0, %s24
      %s42 = sphi 0, %s42
      %s44 = sphi 0, %s42
      %s45 = sphi 0, %s44
      %s59 = sphi 0, %s45
      %s65 = sphi 0, %s67
      %s68 = sphi 0, %s65
      %s69 = sphi 0, %s68
      %s85 = sphi 0, %s69
      %s91 = sphi 0, %s93
      %s94 = sphi 0, %s91
      %s95 = sphi 0, %s94
      %s111 = sphi 0, %s95
      %s115 = sphi 0, %s115
      %s117 = sphi 0, %s115
      %s118 = sphi 0, %s117
      %s132 = sphi 0, %s118
    $region4: #{tpu_custom_call.1} parent=1 // loop_header_branch
      %16 = sbr.rel (%p14) target = $region8
    $region5: #{tpu_custom_call.1} parent=1 // loop_body
      %s18 = ssub.s32 %s13, 1
      %s19 = ssub.s32 %s13, 2
      %s20 = sadd.s32 %s13, 1
      %s22 = sadd.s32 %s21, 1
      %p25 = scmp.eq.s32.totalorder %s13, 2
      %p26 = scmp.ne.s32.totalorder %s21, %s23
      %p27 = scmp.eq.s32.totalorder %s13, 0
      %p28 = por %p26, %p27
      %p29 = scmp.ne.s32.totalorder %s21, %s23
      %p30 = scmp.eq.s32.totalorder %s18, 2
      %p31 = por %p29, %p30
      %p32 = scmp.ne.s32.totalorder %s23, %s24
      %p33 = scmp.eq.s32.totalorder %s18, 0
      %p34 = por %p32, %p33
      %p35 = scmp.ne.s32.totalorder %s23, %s24
      %p36 = scmp.eq.s32.totalorder %s19, 2
      %p37 = por %p35, %p36
      %p39 = scmp.ne.s32.totalorder %s24, %s38
      %p40 = scmp.eq.s32.totalorder %s19, 0
      %p41 = por %p39, %p40
      %s43 = sadd.s32 %s42, 1
      %p46 = scmp.eq.s32.totalorder %s13, 2
      %p47 = scmp.ne.s32.totalorder %s42, %s44
      %p48 = scmp.eq.s32.totalorder %s13, 0
      %p49 = por %p47, %p48
      %p50 = scmp.ne.s32.totalorder %s42, %s44
      %p51 = scmp.eq.s32.totalorder %s18, 2
      %p52 = por %p50, %p51
      %p53 = scmp.ne.s32.totalorder %s44, %s45
      %p54 = scmp.eq.s32.totalorder %s18, 0
      %p55 = por %p53, %p54
      %p56 = scmp.ne.s32.totalorder %s44, %s45
      %p57 = scmp.eq.s32.totalorder %s19, 2
      %p58 = por %p56, %p57
      %p60 = scmp.ne.s32.totalorder %s45, %s59
      %p61 = scmp.eq.s32.totalorder %s19, 0
      %p62 = por %p60, %p61
      %s63 = ssub.s32 %s13, %s20
      %p64 = scmp.eq.s32.totalorder %s63, 0
      %s66 = sadd.s32 %s65, 1
      %s67 = scalar_select %p64, %s65, %s66
      %p70 = pneg %p64
      %p71 = scmp.eq.s32.totalorder %s13, 2
      %p72 = por %p70, %p71
      %p73 = scmp.ne.s32.totalorder %s65, %s68
      %p74 = scmp.eq.s32.totalorder %s13, 0
      %p75 = por %p73, %p74
      %p76 = scmp.ne.s32.totalorder %s65, %s68
      %p77 = scmp.eq.s32.totalorder %s18, 2
      %p78 = por %p76, %p77
      %p79 = scmp.ne.s32.totalorder %s68, %s69
      %p80 = scmp.eq.s32.totalorder %s18, 0
      %p81 = por %p79, %p80
      %p82 = scmp.ne.s32.totalorder %s68, %s69
      %p83 = scmp.eq.s32.totalorder %s19, 2
      %p84 = por %p82, %p83
      %p86 = scmp.ne.s32.totalorder %s69, %s85
      %p87 = scmp.eq.s32.totalorder %s19, 0
      %p88 = por %p86, %p87
      %s89 = ssub.s32 %s13, %s20
      %p90 = scmp.eq.s32.totalorder %s89, 0
      %s92 = sadd.s32 %s91, 1
      %s93 = scalar_select %p90, %s91, %s92
      %p96 = pneg %p90
      %p97 = scmp.eq.s32.totalorder %s13, 2
      %p98 = por %p96, %p97
      %p99 = scmp.ne.s32.totalorder %s91, %s94
      %p100 = scmp.eq.s32.totalorder %s13, 0
      %p101 = por %p99, %p100
      %p102 = scmp.ne.s32.totalorder %s91, %s94
      %p103 = scmp.eq.s32.totalorder %s18, 2
      %p104 = por %p102, %p103
      %p105 = scmp.ne.s32.totalorder %s94, %s95
      %p106 = scmp.eq.s32.totalorder %s18, 0
      %p107 = por %p105, %p106
      %p108 = scmp.ne.s32.totalorder %s94, %s95
      %p109 = scmp.eq.s32.totalorder %s19, 2
      %p110 = por %p108, %p109
      %p112 = scmp.ne.s32.totalorder %s95, %s111
      %p113 = scmp.eq.s32.totalorder %s19, 0
      %p114 = por %p112, %p113
      %s116 = sadd.s32 %s115, 1
      %p119 = scmp.eq.s32.totalorder %s13, 2
      %p120 = scmp.ne.s32.totalorder %s115, %s117
      %p121 = scmp.eq.s32.totalorder %s13, 0
      %p122 = por %p120, %p121
      %p123 = scmp.ne.s32.totalorder %s115, %s117
      %p124 = scmp.eq.s32.totalorder %s18, 2
      %p125 = por %p123, %p124
      %p126 = scmp.ne.s32.totalorder %s117, %s118
      %p127 = scmp.eq.s32.totalorder %s18, 0
      %p128 = por %p126, %p127
      %p129 = scmp.ne.s32.totalorder %s117, %s118
      %p130 = scmp.eq.s32.totalorder %s19, 2
      %p131 = por %p129, %p130
      %p133 = scmp.ne.s32.totalorder %s118, %s132
      %p134 = scmp.eq.s32.totalorder %s19, 0
      %p135 = por %p133, %p134
      %p136 = scmp.le.s32.totalorder 1, %s13
      %p137 = scmp.lt.s32.totalorder %s13, 4
      %p138 = pnand %p136, %p137
      %p139 = pneg %p138
      // Predicated region
      $region9: #{tpu_custom_call.1} parent=5 // pred_check
        _
      $region10: #{tpu_custom_call.1} parent=5 // pred_check_branch
        %141 = sbr.rel (%p138) target = $region12
      $region11: #{tpu_custom_call.1} parent=5 // pred_region
        %s142 = ssub.s32 %s13, 1
        // Predicated region
        $region13: #{tpu_custom_call.1} parent=11 // pred_check
          %p143 = pneg %p34
        $region14: #{tpu_custom_call.1} parent=11 // pred_check_branch
          %145 = sbr.rel (%p143) target = $region16
        $region15: #{tpu_custom_call.1} parent=11 // pred_region
          %s147 = ssub.s32 1024, 1024
          %148 = vsyncadd [#allocation4], %s147
          %s149 = sshll.u32 [#allocation3], 4
          %s150 = int_to_ptr.vmem [resolvable:$true] %s149
          %155 = dma.hbm_to_vmem [thread:$0]  %s0, 1024, %s150, [#allocation4], 64, 64, 4
        $region16: #{tpu_custom_call.1} parent=11 // pred_fallthru
          _
        // Predicated region
        $region17: #{tpu_custom_call.1} parent=11 // pred_check
          %p156 = pneg %p55
        $region18: #{tpu_custom_call.1} parent=11 // pred_check_branch
          %158 = sbr.rel (%p156) target = $region20
        $region19: #{tpu_custom_call.1} parent=11 // pred_region
          %s160 = ssub.s32 1024, 1024
          %161 = vsyncadd [#allocation7], %s160
          %s162 = sshll.u32 [#allocation6], 4
          %s163 = int_to_ptr.vmem [resolvable:$true] %s162
          %168 = dma.hbm_to_vmem [thread:$0]  %s1, 1024, %s163, [#allocation7], 64, 64, 4
        $region20: #{tpu_custom_call.1} parent=11 // pred_fallthru
          _
      $region12: #{tpu_custom_call.1} parent=5 // pred_fallthru
        _
      %p169 = scmp.lt.s32.totalorder %s13, 3
      // Predicated region
      $region21: #{tpu_custom_call.1} parent=5 // pred_check
        %p170 = pneg %p169
      $region22: #{tpu_custom_call.1} parent=5 // pred_check_branch
        %172 = sbr.rel (%p170) target = $region24
      $region23: #{tpu_custom_call.1} parent=5 // pred_region
        // Predicated region
        $region25: #{tpu_custom_call.1} parent=23 // pred_check
          %p173 = pneg %p75
        $region26: #{tpu_custom_call.1} parent=23 // pred_check_branch
          %175 = sbr.rel (%p173) target = $region28
        $region27: #{tpu_custom_call.1} parent=23 // pred_region
          %s176 = sand.u32 %s13, 1
          %s177 = scalar_lea.sflag [#allocation4], %s176
          %s178 = sand.u32 %s65, 1
          %s179 = smul.addr %s178, 128
          %s180 = scalar_lea.vmem [#allocation8], %s179
          %s182 = ssub.s32 2048, 2048
          %183 = vsyncadd %s177, %s182
          %s184 = smul.addr %s13, 32
          %s185 = smul.addr %s184, 64
          %s186 = scalar_lea.hbm %s2, %s185
          %s187 = sshll.u32 %s180, 4
          %s188 = int_to_ptr.vmem [resolvable:$true] %s187
          %193 = dma.hbm_to_vmem [thread:$0]  %s186, 2048, %s188, %s177, 64, 64, 4
        $region28: #{tpu_custom_call.1} parent=23 // pred_fallthru
          _
        // Predicated region
        $region29: #{tpu_custom_call.1} parent=23 // pred_check
          %p194 = pneg %p101
        $region30: #{tpu_custom_call.1} parent=23 // pred_check_branch
          %196 = sbr.rel (%p194) target = $region32
        $region31: #{tpu_custom_call.1} parent=23 // pred_region
          %p197 = scmp.lt.s32.totalorder %s13, 2
          %s198 = scalar_select %p197, %s13, 2
          %s199 = scalar_lea.vmem %s3, %s198
        $region32: #{tpu_custom_call.1} parent=23 // pred_fallthru
          _
      $region24: #{tpu_custom_call.1} parent=5 // pred_fallthru
        _
      %p200 = scmp.le.s32.totalorder 1, %s13
      %p201 = scmp.lt.s32.totalorder %s13, 4
      %p202 = pnand %p200, %p201
      %p203 = pneg %p202
      // Predicated region
      $region33: #{tpu_custom_call.1} parent=5 // pred_check
        _
      $region34: #{tpu_custom_call.1} parent=5 // pred_check_branch
        %205 = sbr.rel (%p202) target = $region36
      $region35: #{tpu_custom_call.1} parent=5 // pred_region
        %s206 = ssub.s32 %s13, 1
        // Predicated region
        $region37: #{tpu_custom_call.1} parent=35 // pred_check
          %p207 = pneg %p34
        $region38: #{tpu_custom_call.1} parent=35 // pred_check_branch
          %209 = sbr.rel (%p207) target = $region40
        $region39: #{tpu_custom_call.1} parent=35 // pred_region
          %210 = dma.done [#allocation4], 1024
        $region40: #{tpu_custom_call.1} parent=35 // pred_fallthru
          _
        // Predicated region
        $region41: #{tpu_custom_call.1} parent=35 // pred_check
          %p211 = pneg %p55
        $region42: #{tpu_custom_call.1} parent=35 // pred_check_branch
          %213 = sbr.rel (%p211) target = $region44
        $region43: #{tpu_custom_call.1} parent=35 // pred_region
          %214 = dma.done [#allocation7], 1024
        $region44: #{tpu_custom_call.1} parent=35 // pred_fallthru
          _
        %s215 = sand.u32 %s18, 1
        %s216 = scalar_lea.sflag [#allocation4], %s215
        %s217 = sand.u32 %s68, 1
        %s218 = smul.addr %s217, 128
        %s219 = scalar_lea.vmem [#allocation8], %s218
        // Predicated region
        $region45: #{tpu_custom_call.1} parent=35 // pred_check
          %p220 = pneg %p81
        $region46: #{tpu_custom_call.1} parent=35 // pred_check_branch
          %222 = sbr.rel (%p220) target = $region48
        $region47: #{tpu_custom_call.1} parent=35 // pred_region
          %223 = dma.done %s216, 2048
        $region48: #{tpu_custom_call.1} parent=35 // pred_fallthru
          _
        %p224 = pneg %p34
        %p225 = pneg %p31
        %p226 = pneg %p55
        %p227 = pneg %p52
        %s228 = sand.u32 %s18, 1
        %s229 = scalar_lea.sflag [#allocation4], %s228
        %s230 = sand.u32 %s68, 1
        %s231 = smul.addr %s230, 128
        %s232 = scalar_lea.vmem [#allocation8], %s231
        %p233 = pneg %p81
        %p234 = pneg %p78
        %p235 = scmp.lt.s32.totalorder %s18, 2
        %s236 = scalar_select %p235, %s18, 2
        %s237 = scalar_lea.vmem %s3, %s236
        %p238 = pneg %p107
        %p239 = pneg %p104
        %p240 = pneg %p128
        %p241 = pneg %p125
        %p242 = scmp.lt.s32.totalorder %s18, 2
        %s243 = scalar_select %p242, %s18, 2
        %s244 = scalar_lea.vmem %s3, %s243
        %p246 = scmp.eq.s32.totalorder %s18, 0
        // Predicated region
        $region49: #{tpu_custom_call.1} parent=35 // pred_check
          %p247 = pneg %p246
        $region50: #{tpu_custom_call.1} parent=35 // pred_check_branch
          %249 = sbr.rel (%p247) target = $region52
        $region51: #{tpu_custom_call.1} parent=35 // pred_region
          %v250 = vld [vmem:[#allocation6] sm:$0xf]
          %v251 = vld [vmem:[#allocation6 + $0x4] sm:$0xf]
          %v252 = vld [vmem:[#allocation6 + $0x8] sm:$0xf]
          %v253 = vld [vmem:[#allocation6 + $0xc] sm:$0xf]
          %v254 = vld [vmem:[#allocation6 + $0x10] sm:$0xf]
          %v255 = vld [vmem:[#allocation6 + $0x14] sm:$0xf]
          %v256 = vld [vmem:[#allocation6 + $0x18] sm:$0xf]
          %v257 = vld [vmem:[#allocation6 + $0x1c] sm:$0xf]
          %v258 = vld [vmem:[#allocation6 + $0x20] sm:$0xf]
          %v259 = vld [vmem:[#allocation6 + $0x24] sm:$0xf]
          %v260 = vld [vmem:[#allocation6 + $0x28] sm:$0xf]
          %v261 = vld [vmem:[#allocation6 + $0x2c] sm:$0xf]
          %v262 = vld [vmem:[#allocation6 + $0x30] sm:$0xf]
          %v263 = vld [vmem:[#allocation6 + $0x34] sm:$0xf]
          %v264 = vld [vmem:[#allocation6 + $0x38] sm:$0xf]
          %v265 = vld [vmem:[#allocation6 + $0x3c] sm:$0xf]
          %266 = vst [vmem:[#allocation2] sm:$0xf] %v250
          %267 = vst [vmem:[#allocation2 + $0x4] sm:$0xf] %v251
          %268 = vst [vmem:[#allocation2 + $0x8] sm:$0xf] %v252
          %269 = vst [vmem:[#allocation2 + $0xc] sm:$0xf] %v253
          %270 = vst [vmem:[#allocation2 + $0x10] sm:$0xf] %v254
          %271 = vst [vmem:[#allocation2 + $0x14] sm:$0xf] %v255
          %272 = vst [vmem:[#allocation2 + $0x18] sm:$0xf] %v256
          %273 = vst [vmem:[#allocation2 + $0x1c] sm:$0xf] %v257
          %274 = vst [vmem:[#allocation2 + $0x20] sm:$0xf] %v258
          %275 = vst [vmem:[#allocation2 + $0x24] sm:$0xf] %v259
          %276 = vst [vmem:[#allocation2 + $0x28] sm:$0xf] %v260
          %277 = vst [vmem:[#allocation2 + $0x2c] sm:$0xf] %v261
          %278 = vst [vmem:[#allocation2 + $0x30] sm:$0xf] %v262
          %279 = vst [vmem:[#allocation2 + $0x34] sm:$0xf] %v263
          %280 = vst [vmem:[#allocation2 + $0x38] sm:$0xf] %v264
          %281 = vst [vmem:[#allocation2 + $0x3c] sm:$0xf] %v265
        $region52: #{tpu_custom_call.1} parent=35 // pred_fallthru
          _
        %v282 = vld [vmem:[#allocation2] sm:$0xf]
        %v283 = vld [vmem:[#allocation2 + $0x4] sm:$0xf]
        %v284 = vld [vmem:[#allocation2 + $0x8] sm:$0xf]
        %v285 = vld [vmem:[#allocation2 + $0xc] sm:$0xf]
        %v286 = vld [vmem:[#allocation2 + $0x10] sm:$0xf]
        %v287 = vld [vmem:[#allocation2 + $0x14] sm:$0xf]
        %v288 = vld [vmem:[#allocation2 + $0x18] sm:$0xf]
        %v289 = vld [vmem:[#allocation2 + $0x1c] sm:$0xf]
        %v290 = vld [vmem:[#allocation2 + $0x20] sm:$0xf]
        %v291 = vld [vmem:[#allocation2 + $0x24] sm:$0xf]
        %v292 = vld [vmem:[#allocation2 + $0x28] sm:$0xf]
        %v293 = vld [vmem:[#allocation2 + $0x2c] sm:$0xf]
        %v294 = vld [vmem:[#allocation2 + $0x30] sm:$0xf]
        %v295 = vld [vmem:[#allocation2 + $0x34] sm:$0xf]
        %v296 = vld [vmem:[#allocation2 + $0x38] sm:$0xf]
        %v297 = vld [vmem:[#allocation2 + $0x3c] sm:$0xf]
        %v298 = vld [vmem:[#allocation3] sm:$0xf]
        %v299 = vld [vmem:[#allocation3 + $0x4] sm:$0xf]
        %v300 = vld [vmem:[#allocation3 + $0x8] sm:$0xf]
        %v301 = vld [vmem:[#allocation3 + $0xc] sm:$0xf]
        %v302 = vld [vmem:[#allocation3 + $0x10] sm:$0xf]
        %v303 = vld [vmem:[#allocation3 + $0x14] sm:$0xf]
        %v304 = vld [vmem:[#allocation3 + $0x18] sm:$0xf]
        %v305 = vld [vmem:[#allocation3 + $0x1c] sm:$0xf]
        %v306 = vld [vmem:[#allocation3 + $0x20] sm:$0xf]
        %v307 = vld [vmem:[#allocation3 + $0x24] sm:$0xf]
        %v308 = vld [vmem:[#allocation3 + $0x28] sm:$0xf]
        %v309 = vld [vmem:[#allocation3 + $0x2c] sm:$0xf]
        %v310 = vld [vmem:[#allocation3 + $0x30] sm:$0xf]
        %v311 = vld [vmem:[#allocation3 + $0x34] sm:$0xf]
        %v312 = vld [vmem:[#allocation3 + $0x38] sm:$0xf]
        %v313 = vld [vmem:[#allocation3 + $0x3c] sm:$0xf]
        %v330 = vunpack.c.l.b16 %v298
        %v331 = vunpack.c.l.b16 %v299
        %v332 = vunpack.c.l.b16 %v300
        %v333 = vunpack.c.l.b16 %v301
        %v334 = vunpack.c.l.b16 %v302
        %v335 = vunpack.c.l.b16 %v303
        %v336 = vunpack.c.l.b16 %v304
        %v337 = vunpack.c.l.b16 %v305
        %v338 = vunpack.c.l.b16 %v306
        %v339 = vunpack.c.l.b16 %v307
        %v340 = vunpack.c.l.b16 %v308
        %v341 = vunpack.c.l.b16 %v309
        %v342 = vunpack.c.l.b16 %v310
        %v343 = vunpack.c.l.b16 %v311
        %v344 = vunpack.c.l.b16 %v312
        %v345 = vunpack.c.l.b16 %v313
        %v346 = vpack.c.b16 %v331, %v330
        %v347 = vpack.c.b16 %v333, %v332
        %v348 = vpack.c.b16 %v335, %v334
        %v349 = vpack.c.b16 %v337, %v336
        %v350 = vpack.c.b16 %v339, %v338
        %v351 = vpack.c.b16 %v341, %v340
        %v352 = vpack.c.b16 %v343, %v342
        %v353 = vpack.c.b16 %v345, %v344
        %v378 = vunpack.c.l.b16 %v282
        %v379 = vunpack.c.l.b16 %v283
        %v380 = vunpack.c.l.b16 %v284
        %v381 = vunpack.c.l.b16 %v285
        %v382 = vunpack.c.l.b16 %v286
        %v383 = vunpack.c.l.b16 %v287
        %v384 = vunpack.c.l.b16 %v288
        %v385 = vunpack.c.l.b16 %v289
        %v386 = vunpack.c.l.b16 %v290
        %v387 = vunpack.c.l.b16 %v291
        %v388 = vunpack.c.l.b16 %v292
        %v389 = vunpack.c.l.b16 %v293
        %v390 = vunpack.c.l.b16 %v294
        %v391 = vunpack.c.l.b16 %v295
        %v392 = vunpack.c.l.b16 %v296
        %v393 = vunpack.c.l.b16 %v297
        %v394 = vpack.c.b16 %v379, %v378
        %v395 = vpack.c.b16 %v381, %v380
        %v396 = vpack.c.b16 %v383, %v382
        %v397 = vpack.c.b16 %v385, %v384
        %v398 = vpack.c.b16 %v387, %v386
        %v399 = vpack.c.b16 %v389, %v388
        %v400 = vpack.c.b16 %v391, %v390
        %v401 = vpack.c.b16 %v393, %v392
        %410 = vmatprep.subr.bf16.mxu0 0
        %411 = vmatpush1.bf16.msra.mxu0 %v401
        %412 = vmatprep.subr.bf16.mxu0 0
        %413 = vmatpush1.bf16.msra.mxu0 %v400
        %414 = vmatprep.subr.bf16.mxu0 0
        %415 = vmatpush1.bf16.msra.mxu0 %v399
        %416 = vmatprep.subr.bf16.mxu0 0
        %417 = vmatpush1.bf16.msra.mxu0 %v398
        %418 = vmatprep.subr.bf16.mxu0 0
        %419 = vmatpush1.bf16.msra.mxu0 %v397
        %420 = vmatprep.subr.bf16.mxu0 0
        %421 = vmatpush1.bf16.msra.mxu0 %v396
        %422 = vmatprep.subr.bf16.mxu0 0
        %423 = vmatpush1.bf16.msra.mxu0 %v395
        %424 = vmatprep.subr.bf16.mxu0 0
        %425 = vmatpush1.bf16.msra.mxu0 %v394
        %426 = vmatprep.subr.bf16.mxu0 0
        %427 = vmatpush2.bf16.msra.mxu0 0
        %428 = vmatprep.subr.bf16.mxu0 0
        %429 = vmatpush2.bf16.msra.mxu0 0
        %430 = vmatprep.subr.bf16.mxu0 0
        %431 = vmatpush2.bf16.msra.mxu0 0
        %432 = vmatprep.subr.bf16.mxu0 0
        %433 = vmatpush2.bf16.msra.mxu0 0
        %434 = vmatprep.subr.bf16.mxu0 0
        %435 = vmatpush2.bf16.msra.mxu0 0
        %436 = vmatprep.subr.bf16.mxu0 0
        %437 = vmatpush2.bf16.msra.mxu0 0
        %438 = vmatprep.subr.bf16.mxu0 0
        %439 = vmatpush2.bf16.msra.mxu0 0
        %440 = vmatprep.subr.bf16.mxu0 0
        %441 = vmatpush2.bf16.msra.mxu0 0
        %442 = vmatprep.mubr.bf16.mxu0 0
        %443 = vmatmul.mubr.bf16.gmra.mxu0 %v346
        %v444 = vpop.f32.mrf.mxu0
        %v445 = vadd.f32 0.0, %v444
        %v446 = vpop.f32.mrf.mxu0
        %v447 = vpop.f32.mrf.mxu0
        %v448 = vadd.f32 0.0, %v447
        %v449 = vpop.f32.mrf.mxu0
        %450 = vmatprep.mubr.bf16.mxu0 0
        %451 = vmatmul.mubr.bf16.gmra.mxu0 %v347
        %v452 = vpop.f32.mrf.mxu0
        %v453 = vadd.f32 0.0, %v452
        %v454 = vpop.f32.mrf.mxu0
        %v455 = vpop.f32.mrf.mxu0
        %v456 = vadd.f32 0.0, %v455
        %v457 = vpop.f32.mrf.mxu0
        %458 = vmatprep.mubr.bf16.mxu0 0
        %459 = vmatmul.mubr.bf16.gmra.mxu0 %v348
        %v460 = vpop.f32.mrf.mxu0
        %v461 = vadd.f32 0.0, %v460
        %v462 = vpop.f32.mrf.mxu0
        %v463 = vpop.f32.mrf.mxu0
        %v464 = vadd.f32 0.0, %v463
        %v465 = vpop.f32.mrf.mxu0
        %466 = vmatprep.mubr.bf16.mxu0 0
        %467 = vmatmul.mubr.bf16.gmra.mxu0 %v349
        %v468 = vpop.f32.mrf.mxu0
        %v469 = vadd.f32 0.0, %v468
        %v470 = vpop.f32.mrf.mxu0
        %v471 = vpop.f32.mrf.mxu0
        %v472 = vadd.f32 0.0, %v471
        %v473 = vpop.f32.mrf.mxu0
        %474 = vmatprep.mubr.bf16.mxu0 0
        %475 = vmatmul.mubr.bf16.gmra.mxu0 %v350
        %v476 = vpop.f32.mrf.mxu0
        %v477 = vadd.f32 0.0, %v476
        %v478 = vpop.f32.mrf.mxu0
        %v479 = vpop.f32.mrf.mxu0
        %v480 = vadd.f32 0.0, %v479
        %v481 = vpop.f32.mrf.mxu0
        %482 = vmatprep.mubr.bf16.mxu0 0
        %483 = vmatmul.mubr.bf16.gmra.mxu0 %v351
        %v484 = vpop.f32.mrf.mxu0
        %v485 = vadd.f32 0.0, %v484
        %v486 = vpop.f32.mrf.mxu0
        %v487 = vpop.f32.mrf.mxu0
        %v488 = vadd.f32 0.0, %v487
        %v489 = vpop.f32.mrf.mxu0
        %490 = vmatprep.mubr.bf16.mxu0 0
        %491 = vmatmul.mubr.bf16.gmra.mxu0 %v352
        %v492 = vpop.f32.mrf.mxu0
        %v493 = vadd.f32 0.0, %v492
        %v494 = vpop.f32.mrf.mxu0
        %v495 = vpop.f32.mrf.mxu0
        %v496 = vadd.f32 0.0, %v495
        %v497 = vpop.f32.mrf.mxu0
        %498 = vmatprep.mubr.bf16.mxu0 0
        %499 = vmatmul.mubr.bf16.gmra.mxu0 %v353
        %v500 = vpop.f32.mrf.mxu0
        %v501 = vadd.f32 0.0, %v500
        %v502 = vpop.f32.mrf.mxu0
        %v503 = vpop.f32.mrf.mxu0
        %v504 = vadd.f32 0.0, %v503
        %v505 = vpop.f32.mrf.mxu0
        %506 = vdwg.mxu0
        %v507 = vpack.c.bf16 %v448, %v445
        %v508 = vpack.c.bf16 %v456, %v453
        %v509 = vpack.c.bf16 %v464, %v461
        %v510 = vpack.c.bf16 %v472, %v469
        %v511 = vpack.c.bf16 %v480, %v477
        %v512 = vpack.c.bf16 %v488, %v485
        %v513 = vpack.c.bf16 %v496, %v493
        %v514 = vpack.c.bf16 %v504, %v501
        %v515 = vld [vmem:[%s219] sm:$0xf]
        %v516 = vld [vmem:[%s219 + $0x4] sm:$0xf]
        %v517 = vld [vmem:[%s219 + $0x8] sm:$0xf]
        %v518 = vld [vmem:[%s219 + $0xc] sm:$0xf]
        %v519 = vld [vmem:[%s219 + $0x10] sm:$0xf]
        %v520 = vld [vmem:[%s219 + $0x14] sm:$0xf]
        %v521 = vld [vmem:[%s219 + $0x18] sm:$0xf]
        %v522 = vld [vmem:[%s219 + $0x1c] sm:$0xf]
        %v523 = vld [vmem:[%s219 + $0x20] sm:$0xf]
        %v524 = vld [vmem:[%s219 + $0x24] sm:$0xf]
        %v525 = vld [vmem:[%s219 + $0x28] sm:$0xf]
        %v526 = vld [vmem:[%s219 + $0x2c] sm:$0xf]
        %v527 = vld [vmem:[%s219 + $0x30] sm:$0xf]
        %v528 = vld [vmem:[%s219 + $0x34] sm:$0xf]
        %v529 = vld [vmem:[%s219 + $0x38] sm:$0xf]
        %v530 = vld [vmem:[%s219 + $0x3c] sm:$0xf]
        %v531 = vld [vmem:[%s219 + $0x40] sm:$0xf]
        %v532 = vld [vmem:[%s219 + $0x44] sm:$0xf]
        %v533 = vld [vmem:[%s219 + $0x48] sm:$0xf]
        %v534 = vld [vmem:[%s219 + $0x4c] sm:$0xf]
        %v535 = vld [vmem:[%s219 + $0x50] sm:$0xf]
        %v536 = vld [vmem:[%s219 + $0x54] sm:$0xf]
        %v537 = vld [vmem:[%s219 + $0x58] sm:$0xf]
        %v538 = vld [vmem:[%s219 + $0x5c] sm:$0xf]
        %v539 = vld [vmem:[%s219 + $0x60] sm:$0xf]
        %v540 = vld [vmem:[%s219 + $0x64] sm:$0xf]
        %v541 = vld [vmem:[%s219 + $0x68] sm:$0xf]
        %v542 = vld [vmem:[%s219 + $0x6c] sm:$0xf]
        %v543 = vld [vmem:[%s219 + $0x70] sm:$0xf]
        %v544 = vld [vmem:[%s219 + $0x74] sm:$0xf]
        %v545 = vld [vmem:[%s219 + $0x78] sm:$0xf]
        %v546 = vld [vmem:[%s219 + $0x7c] sm:$0xf]
        %v547 = vld [vmem:[%s244] sm:$0x1]
        %v549 = vlaneseq
        %v550 = vshrl.u32 %v549, 7
        %v551 = vsub.s32 0, %v550
        %v552 = vrot.slane %v547, %v551
        %v586 = vunpack.c.l.b16 %v515
        %v587 = vunpack.c.l.b16 %v516
        %v588 = vunpack.c.l.b16 %v517
        %v589 = vunpack.c.l.b16 %v518
        %v590 = vunpack.c.l.b16 %v519
        %v591 = vunpack.c.l.b16 %v520
        %v592 = vunpack.c.l.b16 %v521
        %v593 = vunpack.c.l.b16 %v522
        %v594 = vunpack.c.l.b16 %v523
        %v595 = vunpack.c.l.b16 %v524
        %v596 = vunpack.c.l.b16 %v525
        %v597 = vunpack.c.l.b16 %v526
        %v598 = vunpack.c.l.b16 %v527
        %v599 = vunpack.c.l.b16 %v528
        %v600 = vunpack.c.l.b16 %v529
        %v601 = vunpack.c.l.b16 %v530
        %v602 = vunpack.c.l.b16 %v531
        %v603 = vunpack.c.l.b16 %v532
        %v604 = vunpack.c.l.b16 %v533
        %v605 = vunpack.c.l.b16 %v534
        %v606 = vunpack.c.l.b16 %v535
        %v607 = vunpack.c.l.b16 %v536
        %v608 = vunpack.c.l.b16 %v537
        %v609 = vunpack.c.l.b16 %v538
        %v610 = vunpack.c.l.b16 %v539
        %v611 = vunpack.c.l.b16 %v540
        %v612 = vunpack.c.l.b16 %v541
        %v613 = vunpack.c.l.b16 %v542
        %v614 = vunpack.c.l.b16 %v543
        %v615 = vunpack.c.l.b16 %v544
        %v616 = vunpack.c.l.b16 %v545
        %v617 = vunpack.c.l.b16 %v546
        %v618 = vpack.c.b16 %v587, %v586
        %v619 = vpack.c.b16 %v589, %v588
        %v620 = vpack.c.b16 %v591, %v590
        %v621 = vpack.c.b16 %v593, %v592
        %v622 = vpack.c.b16 %v595, %v594
        %v623 = vpack.c.b16 %v597, %v596
        %v624 = vpack.c.b16 %v599, %v598
        %v625 = vpack.c.b16 %v601, %v600
        %v626 = vpack.c.b16 %v603, %v602
        %v627 = vpack.c.b16 %v605, %v604
        %v628 = vpack.c.b16 %v607, %v606
        %v629 = vpack.c.b16 %v609, %v608
        %v630 = vpack.c.b16 %v611, %v610
        %v631 = vpack.c.b16 %v613, %v612
        %v632 = vpack.c.b16 %v615, %v614
        %v633 = vpack.c.b16 %v617, %v616
        %650 = vmatprep.subr.bf16.mxu0 0
        %651 = vmatpush1.bf16.msra.mxu0 %v625
        %652 = vmatprep.subr.bf16.mxu0 0
        %653 = vmatpush1.bf16.msra.mxu0 %v624
        %654 = vmatprep.subr.bf16.mxu0 0
        %655 = vmatpush1.bf16.msra.mxu0 %v623
        %656 = vmatprep.subr.bf16.mxu0 0
        %657 = vmatpush1.bf16.msra.mxu0 %v622
        %658 = vmatprep.subr.bf16.mxu0 0
        %659 = vmatpush1.bf16.msra.mxu0 %v621
        %660 = vmatprep.subr.bf16.mxu0 0
        %661 = vmatpush1.bf16.msra.mxu0 %v620
        %662 = vmatprep.subr.bf16.mxu0 0
        %663 = vmatpush1.bf16.msra.mxu0 %v619
        %664 = vmatprep.subr.bf16.mxu0 0
        %665 = vmatpush1.bf16.msra.mxu0 %v618
        %666 = vmatprep.subr.bf16.mxu0 0
        %667 = vmatpush2.bf16.msra.mxu0 %v633
        %668 = vmatprep.subr.bf16.mxu0 0
        %669 = vmatpush2.bf16.msra.mxu0 %v632
        %670 = vmatprep.subr.bf16.mxu0 0
        %671 = vmatpush2.bf16.msra.mxu0 %v631
        %672 = vmatprep.subr.bf16.mxu0 0
        %673 = vmatpush2.bf16.msra.mxu0 %v630
        %674 = vmatprep.subr.bf16.mxu0 0
        %675 = vmatpush2.bf16.msra.mxu0 %v629
        %676 = vmatprep.subr.bf16.mxu0 0
        %677 = vmatpush2.bf16.msra.mxu0 %v628
        %678 = vmatprep.subr.bf16.mxu0 0
        %679 = vmatpush2.bf16.msra.mxu0 %v627
        %680 = vmatprep.subr.bf16.mxu0 0
        %681 = vmatpush2.bf16.msra.mxu0 %v626
        %682 = vmatprep.mubr.bf16.mxu0 %v394
        %683 = vmatmul.mubr.bf16.gmra.mxu0 %v507
        %v684 = vpop.f32.mrf.mxu0
        %v685 = vadd.f32 %v552, %v684
        %v686 = vpop.f32.mrf.mxu0
        %v687 = vpop.f32.mrf.mxu0
        %v688 = vadd.f32 %v552, %v687
        %v689 = vpop.f32.mrf.mxu0
        %690 = vmatprep.mubr.bf16.mxu0 %v395
        %691 = vmatmul.mubr.bf16.gmra.mxu0 %v508
        %v692 = vpop.f32.mrf.mxu0
        %v693 = vadd.f32 %v552, %v692
        %v694 = vpop.f32.mrf.mxu0
        %v695 = vpop.f32.mrf.mxu0
        %v696 = vadd.f32 %v552, %v695
        %v697 = vpop.f32.mrf.mxu0
        %698 = vmatprep.mubr.bf16.mxu0 %v396
        %699 = vmatmul.mubr.bf16.gmra.mxu0 %v509
        %v700 = vpop.f32.mrf.mxu0
        %v701 = vadd.f32 %v552, %v700
        %v702 = vpop.f32.mrf.mxu0
        %v703 = vpop.f32.mrf.mxu0
        %v704 = vadd.f32 %v552, %v703
        %v705 = vpop.f32.mrf.mxu0
        %706 = vmatprep.mubr.bf16.mxu0 %v397
        %707 = vmatmul.mubr.bf16.gmra.mxu0 %v510
        %v708 = vpop.f32.mrf.mxu0
        %v709 = vadd.f32 %v552, %v708
        %v710 = vpop.f32.mrf.mxu0
        %v711 = vpop.f32.mrf.mxu0
        %v712 = vadd.f32 %v552, %v711
        %v713 = vpop.f32.mrf.mxu0
        %714 = vmatprep.mubr.bf16.mxu0 %v398
        %715 = vmatmul.mubr.bf16.gmra.mxu0 %v511
        %v716 = vpop.f32.mrf.mxu0
        %v717 = vadd.f32 %v552, %v716
        %v718 = vpop.f32.mrf.mxu0
        %v719 = vpop.f32.mrf.mxu0
        %v720 = vadd.f32 %v552, %v719
        %v721 = vpop.f32.mrf.mxu0
        %722 = vmatprep.mubr.bf16.mxu0 %v399
        %723 = vmatmul.mubr.bf16.gmra.mxu0 %v512
        %v724 = vpop.f32.mrf.mxu0
        %v725 = vadd.f32 %v552, %v724
        %v726 = vpop.f32.mrf.mxu0
        %v727 = vpop.f32.mrf.mxu0
        %v728 = vadd.f32 %v552, %v727
        %v729 = vpop.f32.mrf.mxu0
        %730 = vmatprep.mubr.bf16.mxu0 %v400
        %731 = vmatmul.mubr.bf16.gmra.mxu0 %v513
        %v732 = vpop.f32.mrf.mxu0
        %v733 = vadd.f32 %v552, %v732
        %v734 = vpop.f32.mrf.mxu0
        %v735 = vpop.f32.mrf.mxu0
        %v736 = vadd.f32 %v552, %v735
        %v737 = vpop.f32.mrf.mxu0
        %738 = vmatprep.mubr.bf16.mxu0 %v401
        %739 = vmatmul.mubr.bf16.gmra.mxu0 %v514
        %v740 = vpop.f32.mrf.mxu0
        %v741 = vadd.f32 %v552, %v740
        %v742 = vpop.f32.mrf.mxu0
        %v743 = vpop.f32.mrf.mxu0
        %v744 = vadd.f32 %v552, %v743
        %v745 = vpop.f32.mrf.mxu0
        %746 = vdwg.mxu0
        %p747 = scmp.eq.s32.totalorder %s18, 2
        %p748 = scmp.ne.s32.totalorder %s18, 2
        // Predicated region
        $region53: #{tpu_custom_call.1} parent=35 // pred_check
          %p749 = pneg %p748
        $region54: #{tpu_custom_call.1} parent=35 // pred_check_branch
          %751 = sbr.rel (%p749) target = $region56
        $region55: #{tpu_custom_call.1} parent=35 // pred_region
          %v752 = vmax.f32 %v685, 0.0
          %v753 = vmax.f32 %v688, 0.0
          %v754 = vmax.f32 %v693, 0.0
          %v755 = vmax.f32 %v696, 0.0
          %v756 = vmax.f32 %v701, 0.0
          %v757 = vmax.f32 %v704, 0.0
          %v758 = vmax.f32 %v709, 0.0
          %v759 = vmax.f32 %v712, 0.0
          %v760 = vmax.f32 %v717, 0.0
          %v761 = vmax.f32 %v720, 0.0
          %v762 = vmax.f32 %v725, 0.0
          %v763 = vmax.f32 %v728, 0.0
          %v764 = vmax.f32 %v733, 0.0
          %v765 = vmax.f32 %v736, 0.0
          %v766 = vmax.f32 %v741, 0.0
          %v767 = vmax.f32 %v744, 0.0
          %v768 = vpack.c.bf16 %v753, %v752
          %v769 = vpack.c.bf16 %v755, %v754
          %v770 = vpack.c.bf16 %v757, %v756
          %v771 = vpack.c.bf16 %v759, %v758
          %v772 = vpack.c.bf16 %v761, %v760
          %v773 = vpack.c.bf16 %v763, %v762
          %v774 = vpack.c.bf16 %v765, %v764
          %v775 = vpack.c.bf16 %v767, %v766
          %v784 = vunpack.c.l.b16 %v768
          %v785 = vunpack.c.h.b16 %v768
          %v786 = vunpack.c.l.b16 %v769
          %v787 = vunpack.c.h.b16 %v769
          %v788 = vunpack.c.l.b16 %v770
          %v789 = vunpack.c.h.b16 %v770
          %v790 = vunpack.c.l.b16 %v771
          %v791 = vunpack.c.h.b16 %v771
          %v792 = vunpack.c.l.b16 %v772
          %v793 = vunpack.c.h.b16 %v772
          %v794 = vunpack.c.l.b16 %v773
          %v795 = vunpack.c.h.b16 %v773
          %v796 = vunpack.c.l.b16 %v774
          %v797 = vunpack.c.h.b16 %v774
          %v798 = vunpack.c.l.b16 %v775
          %v799 = vunpack.c.h.b16 %v775
          %v800 = vpack.c.b16 %v784, %v784
          %v801 = vpack.c.b16 %v785, %v785
          %v802 = vpack.c.b16 %v786, %v786
          %v803 = vpack.c.b16 %v787, %v787
          %v804 = vpack.c.b16 %v788, %v788
          %v805 = vpack.c.b16 %v789, %v789
          %v806 = vpack.c.b16 %v790, %v790
          %v807 = vpack.c.b16 %v791, %v791
          %v808 = vpack.c.b16 %v792, %v792
          %v809 = vpack.c.b16 %v793, %v793
          %v810 = vpack.c.b16 %v794, %v794
          %v811 = vpack.c.b16 %v795, %v795
          %v812 = vpack.c.b16 %v796, %v796
          %v813 = vpack.c.b16 %v797, %v797
          %v814 = vpack.c.b16 %v798, %v798
          %v815 = vpack.c.b16 %v799, %v799
          %832 = vst [vmem:[#allocation2] sm:$0xf] %v800
          %833 = vst [vmem:[#allocation2 + $0x4] sm:$0xf] %v801
          %834 = vst [vmem:[#allocation2 + $0x8] sm:$0xf] %v802
          %835 = vst [vmem:[#allocation2 + $0xc] sm:$0xf] %v803
          %836 = vst [vmem:[#allocation2 + $0x10] sm:$0xf] %v804
          %837 = vst [vmem:[#allocation2 + $0x14] sm:$0xf] %v805
          %838 = vst [vmem:[#allocation2 + $0x18] sm:$0xf] %v806
          %839 = vst [vmem:[#allocation2 + $0x1c] sm:$0xf] %v807
          %840 = vst [vmem:[#allocation2 + $0x20] sm:$0xf] %v808
          %841 = vst [vmem:[#allocation2 + $0x24] sm:$0xf] %v809
          %842 = vst [vmem:[#allocation2 + $0x28] sm:$0xf] %v810
          %843 = vst [vmem:[#allocation2 + $0x2c] sm:$0xf] %v811
          %844 = vst [vmem:[#allocation2 + $0x30] sm:$0xf] %v812
          %845 = vst [vmem:[#allocation2 + $0x34] sm:$0xf] %v813
          %846 = vst [vmem:[#allocation2 + $0x38] sm:$0xf] %v814
          %847 = vst [vmem:[#allocation2 + $0x3c] sm:$0xf] %v815
        $region56: #{tpu_custom_call.1} parent=35 // pred_fallthru
          _
        // Predicated region
        $region57: #{tpu_custom_call.1} parent=35 // pred_check
          %p848 = pneg %p747
        $region58: #{tpu_custom_call.1} parent=35 // pred_check_branch
          %850 = sbr.rel (%p848) target = $region60
        $region59: #{tpu_custom_call.1} parent=35 // pred_region
          %v851 = vpack.c.bf16 %v688, %v685
          %v852 = vpack.c.bf16 %v696, %v693
          %v853 = vpack.c.bf16 %v704, %v701
          %v854 = vpack.c.bf16 %v712, %v709
          %v855 = vpack.c.bf16 %v720, %v717
          %v856 = vpack.c.bf16 %v728, %v725
          %v857 = vpack.c.bf16 %v736, %v733
          %v858 = vpack.c.bf16 %v744, %v741
          %v867 = vunpack.c.l.b16 %v851
          %v868 = vunpack.c.h.b16 %v851
          %v869 = vunpack.c.l.b16 %v852
          %v870 = vunpack.c.h.b16 %v852
          %v871 = vunpack.c.l.b16 %v853
          %v872 = vunpack.c.h.b16 %v853
          %v873 = vunpack.c.l.b16 %v854
          %v874 = vunpack.c.h.b16 %v854
          %v875 = vunpack.c.l.b16 %v855
          %v876 = vunpack.c.h.b16 %v855
          %v877 = vunpack.c.l.b16 %v856
          %v878 = vunpack.c.h.b16 %v856
          %v879 = vunpack.c.l.b16 %v857
          %v880 = vunpack.c.h.b16 %v857
          %v881 = vunpack.c.l.b16 %v858
          %v882 = vunpack.c.h.b16 %v858
          %v883 = vpack.c.b16 %v867, %v867
          %v884 = vpack.c.b16 %v868, %v868
          %v885 = vpack.c.b16 %v869, %v869
          %v886 = vpack.c.b16 %v870, %v870
          %v887 = vpack.c.b16 %v871, %v871
          %v888 = vpack.c.b16 %v872, %v872
          %v889 = vpack.c.b16 %v873, %v873
          %v890 = vpack.c.b16 %v874, %v874
          %v891 = vpack.c.b16 %v875, %v875
          %v892 = vpack.c.b16 %v876, %v876
          %v893 = vpack.c.b16 %v877, %v877
          %v894 = vpack.c.b16 %v878, %v878
          %v895 = vpack.c.b16 %v879, %v879
          %v896 = vpack.c.b16 %v880, %v880
          %v897 = vpack.c.b16 %v881, %v881
          %v898 = vpack.c.b16 %v882, %v882
          %915 = vst [vmem:[#allocation9] sm:$0xf] %v883
          %916 = vst [vmem:[#allocation9 + $0x4] sm:$0xf] %v884
          %917 = vst [vmem:[#allocation9 + $0x8] sm:$0xf] %v885
          %918 = vst [vmem:[#allocation9 + $0xc] sm:$0xf] %v886
          %919 = vst [vmem:[#allocation9 + $0x10] sm:$0xf] %v887
          %920 = vst [vmem:[#allocation9 + $0x14] sm:$0xf] %v888
          %921 = vst [vmem:[#allocation9 + $0x18] sm:$0xf] %v889
          %922 = vst [vmem:[#allocation9 + $0x1c] sm:$0xf] %v890
          %923 = vst [vmem:[#allocation9 + $0x20] sm:$0xf] %v891
          %924 = vst [vmem:[#allocation9 + $0x24] sm:$0xf] %v892
          %925 = vst [vmem:[#allocation9 + $0x28] sm:$0xf] %v893
          %926 = vst [vmem:[#allocation9 + $0x2c] sm:$0xf] %v894
          %927 = vst [vmem:[#allocation9 + $0x30] sm:$0xf] %v895
          %928 = vst [vmem:[#allocation9 + $0x34] sm:$0xf] %v896
          %929 = vst [vmem:[#allocation9 + $0x38] sm:$0xf] %v897
          %930 = vst [vmem:[#allocation9 + $0x3c] sm:$0xf] %v898
        $region60: #{tpu_custom_call.1} parent=35 // pred_fallthru
          _
        // Predicated region
        $region61: #{tpu_custom_call.1} parent=35 // pred_check
          %p931 = pneg %p125
        $region62: #{tpu_custom_call.1} parent=35 // pred_check_branch
          %933 = sbr.rel (%p931) target = $region64
        $region63: #{tpu_custom_call.1} parent=35 // pred_region
          %s935 = ssub.s32 1024, 1024
          %936 = vsyncadd [#allocation5], %s935
          %s937 = sshll.u32 [#allocation9], 4
          %s938 = int_to_ptr.vmem [resolvable:$true] %s937
          %943 = dma.vmem_to_hbm [thread:$0]  %s938, 1024, %s4, [#allocation5], 64, 64, 4
        $region64: #{tpu_custom_call.1} parent=35 // pred_fallthru
          _
        // Predicated region
        $region65: #{tpu_custom_call.1} parent=35 // pred_check
          %p944 = pneg %p125
        $region66: #{tpu_custom_call.1} parent=35 // pred_check_branch
          %946 = sbr.rel (%p944) target = $region68
        $region67: #{tpu_custom_call.1} parent=35 // pred_region
          %947 = dma.done [#allocation5], 1024
        $region68: #{tpu_custom_call.1} parent=35 // pred_fallthru
          _
      $region36: #{tpu_custom_call.1} parent=5 // pred_fallthru
        _
      %p948 = scmp.le.s32.totalorder 2, %s13
      // Predicated region
      $region69: #{tpu_custom_call.1} parent=5 // pred_check
        %p949 = pneg %p948
      $region70: #{tpu_custom_call.1} parent=5 // pred_check_branch
        %951 = sbr.rel (%p949) target = $region72
      $region71: #{tpu_custom_call.1} parent=5 // pred_region
        %s952 = ssub.s32 %s13, 2
      $region72: #{tpu_custom_call.1} parent=5 // pred_fallthru
        _
    $region6: #{tpu_custom_call.1} parent=1 // loop_footer
      %s17 = sadd.s32 1, %s13
    $region7: #{tpu_custom_call.1} parent=1 // loop_footer_branch
      %12 = sbr.rel target = $region3
    $region8: #{tpu_custom_call.1} parent=1 // loop_exit
      _
    %953 = vsyncpa [#allocation4], 1
    %s954 = scalar_lea.sflag [#allocation4], 1
    %955 = vsyncpa %s954, 1
    %956 = vsyncpa [#allocation7], 1
    %957 = vsyncpa [#allocation5], 1
    %s958 = scalar_lea.sflag [#allocation5], 1
    %959 = vsyncpa %s958, 1

</llo_original>
